<compile_context>
chip_gen: v6e
topology: v6e:2x2x1
jax: 0.10.0
libtpu: 0.0.40
codegen_flags: <defaults>
</compile_context>

<pallas_src>
import functools

import jax
import jax.numpy as jnp
from jax.experimental import pallas as pl
from jax.experimental.pallas import tpu as pltpu

LN_EPS = 1e-5  # PyTorch nn.LayerNorm default


# ---------------------------------------------------------------------------
# VMEM budgeting (generation-aware).
# ---------------------------------------------------------------------------
@functools.lru_cache(maxsize=1)
def _vmem_capacity_bytes():
    """Physical VMEM per TensorCore; conservative v7x fallback if unknown."""
    try:
        return int(pltpu.get_tpu_info().vmem_capacity_bytes)
    except Exception:
        return 64 * 1024 * 1024  # v7x per-TC VMEM (smallest of v5e/v6e/v7x)


@functools.lru_cache(maxsize=1)
def _vmem_limit_bytes():
    """Scoped-VMEM limit: ~75% of physical, leaving compiler headroom."""
    return min(int(_vmem_capacity_bytes() * 3 // 4), 100 * 1024 * 1024)


def _sublane_pack(dtype):
    """Rows per packed sublane group for this storage dtype."""
    itemsize = jnp.dtype(dtype).itemsize
    if itemsize >= 4:
        return 8
    if itemsize == 2:
        return 16
    return 32


def _round_up(x, m):
    return -(-x // m) * m


def _choose_row_tile(rows, d, x_dtype, out_dtype, d_out=None, weight_bytes=0):
    """Largest sublane-aligned row tile whose double-buffered working set
    (in/out tiles + f32 intermediates + 2x resident weight) fits the budget,
    capped so the row grid keeps >= 2 steps for v7x's two TensorCores."""
    pack = _sublane_pack(x_dtype)
    d_out = d if d_out is None else d_out
    isx = jnp.dtype(x_dtype).itemsize
    iso = jnp.dtype(out_dtype).itemsize
    # 2x (double-buffered) in + out tiles, plus f32 x/y intermediates.
    bytes_per_row = 2 * isx * d + 2 * iso * d_out + 4 * d + 4 * d_out
    # Constant-index (weight) BlockSpecs are still double-buffered: 2x.
    budget = int(_vmem_limit_bytes() * 0.6) - 2 * weight_bytes
    tile = max(pack, (max(budget, bytes_per_row) // bytes_per_row) // pack * pack)
    tile = min(tile, _round_up(rows, pack))
    if rows > pack:
        # v7x megacore: ensure at least 2 grid steps so both TCs get work.
        tile = min(tile, _round_up((rows + 1) // 2, pack))
    return max(pack, tile)


def _rows_of(shape):
    rows = 1
    for s in shape[:-1]:
        rows *= s
    return rows


# ---------------------------------------------------------------------------
# Kernels.
# ---------------------------------------------------------------------------
def _ln_tile(x_ref, g_ref, b_ref):
    """Normalize one (TM, D) tile in f32 using two-pass statistics."""
    x = x_ref[...].astype(jnp.float32)
    inv_d = 1.0 / x.shape[-1]
    mean = jnp.sum(x, axis=-1, keepdims=True) * inv_d
    xc = x - mean
    var = jnp.sum(xc * xc, axis=-1, keepdims=True) * inv_d
    inv = jax.lax.rsqrt(var + LN_EPS)
    gamma = g_ref[...].astype(jnp.float32)
    beta = b_ref[...].astype(jnp.float32)
    return xc * inv * gamma + beta


def _layernorm_kernel(x_ref, g_ref, b_ref, o_ref):
    o_ref[...] = _ln_tile(x_ref, g_ref, b_ref).astype(o_ref.dtype)


def _layernorm_linear_kernel(x_ref, g_ref, b_ref, w_ref, wb_ref, o_ref):
    # Fused: LayerNorm tile -> MXU matmul with the resident (bf16) weight
    # block; f32 accumulation and f32 bias add.
    y = _ln_tile(x_ref, g_ref, b_ref)
    acc = jnp.dot(y.astype(w_ref.dtype), w_ref[...],
                  preferred_element_type=jnp.float32)
    acc = acc + wb_ref[...].astype(jnp.float32)
    o_ref[...] = acc.astype(o_ref.dtype)


# ---------------------------------------------------------------------------
# Wrappers.
# ---------------------------------------------------------------------------
@functools.partial(jax.jit, static_argnames=("row_tile",))
def pallas_layernorm(x, gamma, beta, row_tile=None):
    """LayerNorm over the last axis of x (any leading shape), in Pallas."""
    orig_shape = x.shape
    d = orig_shape[-1]
    rows = _rows_of(orig_shape)
    if row_tile is None:
        row_tile = _choose_row_tile(rows, d, x.dtype, x.dtype)

    x2 = x.reshape(rows, d)
    g2 = gamma.reshape(1, d)
    b2 = beta.reshape(1, d)

    # No padding: Pallas masks the partial tail block; rows are independent,
    # so garbage in the tail input block never reaches the output.
    grid = (pl.cdiv(rows, row_tile),)
    out = pl.pallas_call(
        _layernorm_kernel,
        out_shape=jax.ShapeDtypeStruct((rows, d), x.dtype),
        grid_spec=pltpu.PrefetchScalarGridSpec(
            num_scalar_prefetch=0,
            grid=grid,
            in_specs=[
                pl.BlockSpec((row_tile, d), lambda i: (i, 0)),
                pl.BlockSpec((1, d), lambda i: (0, 0)),
                pl.BlockSpec((1, d), lambda i: (0, 0)),
            ],
            out_specs=pl.BlockSpec((row_tile, d), lambda i: (i, 0)),
        ),
        compiler_params=pltpu.CompilerParams(
            dimension_semantics=("parallel",),
            vmem_limit_bytes=_vmem_limit_bytes(),
        ),
    )(x2, g2, b2)
    return out.reshape(orig_shape)


@functools.partial(jax.jit, static_argnames=("row_tile",))
def pallas_prenorm_linear(x, gamma, beta, w, wb, row_tile=None):
    """Fused LayerNorm(last axis) + Linear(D -> D_out) in one Pallas kernel."""
    orig_shape = x.shape
    d = orig_shape[-1]
    d_out = w.shape[-1]
    rows = _rows_of(orig_shape)

    x2 = x.reshape(rows, d)
    g2 = gamma.reshape(1, d)
    b2 = beta.reshape(1, d)
    # bf16 MXU inputs (the kernel still accumulates in f32): faster matmul on
    # all generations and half the resident-weight VMEM footprint.
    w2 = w.reshape(d, d_out)
    if w2.dtype == jnp.float32:
        w2 = w2.astype(jnp.bfloat16)
    wb2 = wb.reshape(1, d_out).astype(jnp.float32)

    weight_bytes = d * d_out * jnp.dtype(w2.dtype).itemsize
    if row_tile is None:
        row_tile = _choose_row_tile(rows, d, x.dtype, x.dtype,
                                    d_out=d_out, weight_bytes=weight_bytes)

    # TODO(synk): for large D/D_out, add a second "parallel" grid axis tiling
    # d_out (256-aligned on v6e/v7x, 128 on v5e) and/or stage the weight once
    # into a VMEM scratch instead of a double-buffered constant-index block.
    grid = (pl.cdiv(rows, row_tile),)
    out = pl.pallas_call(
        _layernorm_linear_kernel,
        out_shape=jax.ShapeDtypeStruct((rows, d_out), x.dtype),
        grid_spec=pltpu.PrefetchScalarGridSpec(
            num_scalar_prefetch=0,
            grid=grid,
            in_specs=[
                pl.BlockSpec((row_tile, d), lambda i: (i, 0)),
                pl.BlockSpec((1, d), lambda i: (0, 0)),
                pl.BlockSpec((1, d), lambda i: (0, 0)),
                pl.BlockSpec((d, d_out), lambda i: (0, 0)),
                pl.BlockSpec((1, d_out), lambda i: (0, 0)),
            ],
            out_specs=pl.BlockSpec((row_tile, d_out), lambda i: (i, 0)),
        ),
        compiler_params=pltpu.CompilerParams(
            dimension_semantics=("parallel",),
            vmem_limit_bytes=_vmem_limit_bytes(),
        ),
    )(x2, g2, b2, w2, wb2)
    return out.reshape(orig_shape[:-1] + (d_out,))


# ---------------------------------------------------------------------------
# Module equivalents.
# ---------------------------------------------------------------------------
class Linear:
    """Deterministic Linear(D, D_out) used as the representative wrapped fn."""

    def __init__(self, w, b):
        self.w = w
        self.b = b

    def __call__(self, y):
        return y @ self.w + self.b


class PreNorm:
    """JAX/Pallas equivalent of the PyTorch PreNorm module."""

    def __init__(self, dim, fn):
        self.dim = dim
        self.fn = fn
        # nn.LayerNorm default init: weight = ones, bias = zeros.
        self.gamma = jnp.ones((dim,), dtype=jnp.float32)
        self.beta = jnp.zeros((dim,), dtype=jnp.float32)

    def __call__(self, x, **kwargs):
        # Fast path: fuse a plain Linear fn into the LayerNorm kernel so the
        # normalized activations never round-trip through HBM.
        if isinstance(self.fn, Linear) and not kwargs:
            return pallas_prenorm_linear(x, self.gamma, self.beta,
                                         self.fn.w, self.fn.b)
        # Generic path: Pallas LayerNorm + arbitrary JAX callable fn.
        return self.fn(pallas_layernorm(x, self.gamma, self.beta), **kwargs)


def _layernorm_ref(x, gamma, beta):
    mean = jnp.mean(x, axis=-1, keepdims=True)
    var = jnp.mean((x - mean) ** 2, axis=-1, keepdims=True)
    return (x - mean) / jnp.sqrt(var + LN_EPS) * gamma + beta


if __name__ == "__main__":
    key = jax.random.PRNGKey(0)
    # Small but lane-dense shapes: D=128 keeps the output block's last axis a
    # full multiple of 128 (no masked vst.msk partial stores).
    B, N, D = 2, 8, 128
    kx, kw, kb, kx2 = jax.random.split(key, 4)
    x = jax.random.normal(kx, (B, N, D), dtype=jnp.float32)

    # Representative wrapped fn: deterministic Linear(D, D).
    w = jax.random.normal(kw, (D, D), dtype=jnp.float32) * 0.02
    b = jax.random.normal(kb, (D,), dtype=jnp.float32) * 0.02
    model = PreNorm(D, Linear(w, b))

    # --- fused path (LayerNorm + Linear in one kernel) ---
    out = jax.block_until_ready(model(x))
    ref = _layernorm_ref(x, model.gamma, model.beta) @ w + b
    assert out.shape == (B, N, D)
    # The fused kernel feeds the MXU bf16 inputs (with f32 accumulation);
    # allow for that quantization vs the pure-f32 reference.
    assert jnp.allclose(out, ref, atol=2e-2, rtol=2e-2), "fused PreNorm mismatch"

    # --- generic-fn path + non-divisible row count (masked tail block) ---
    x_odd = jax.random.normal(kx2, (3, 5, D), dtype=jnp.float32)  # 15 rows
    generic = PreNorm(D, lambda y: y * 2.0 + 1.0)
    out2 = jax.block_until_ready(generic(x_odd))
    ref2 = _layernorm_ref(x_odd, generic.gamma, generic.beta) * 2.0 + 1.0
    assert out2.shape == x_odd.shape
    assert jnp.allclose(out2, ref2, atol=1e-4, rtol=1e-4), "LayerNorm mismatch"

    print("KERNEL_OK")
</pallas_src>

<mosaic_0001>
module attributes {stable_mosaic.version = 11 : i64} {
  func.func @_layernorm_linear_kernel(%arg0: i32, %arg1: memref<8x128xf32, #tpu.memory_space<vmem>>, %arg2: memref<1x128xf32, #tpu.memory_space<vmem>>, %arg3: memref<1x128xf32, #tpu.memory_space<vmem>>, %arg4: memref<128x128xbf16, #tpu.memory_space<vmem>>, %arg5: memref<1x128xf32, #tpu.memory_space<vmem>>, %arg6: memref<8x128xf32, #tpu.memory_space<vmem>>) attributes {dimension_semantics = [#tpu.dimension_semantics<parallel>], iteration_bounds = array<i64: 2>, scalar_prefetch = 0 : i64, scratch_operands = 0 : i64, tpu.core_type = #tpu.core_type<tc>, window_params = [{transform_indices = @transform_0, window_bounds = array<i64: 8, 128>}, {pipeline_mode = #tpu.pipeline_mode<synchronous>, transform_indices = @transform_1, window_bounds = array<i64: 1, 128>}, {pipeline_mode = #tpu.pipeline_mode<synchronous>, transform_indices = @transform_2, window_bounds = array<i64: 1, 128>}, {pipeline_mode = #tpu.pipeline_mode<synchronous>, transform_indices = @transform_3, window_bounds = array<i64: 128, 128>}, {pipeline_mode = #tpu.pipeline_mode<synchronous>, transform_indices = @transform_4, window_bounds = array<i64: 1, 128>}, {transform_indices = @transform_5, window_bounds = array<i64: 8, 128>}]} {
    %c0 = arith.constant 0 : index
    %c0_0 = arith.constant 0 : index
    %0 = vector.load %arg1[%c0, %c0_0] : memref<8x128xf32, #tpu.memory_space<vmem>>, vector<8x128xf32>
    %cst = arith.constant dense<0.000000e+00> : vector<8xf32>
    %1 = vector.multi_reduction <add>, %0, %cst [1] : vector<8x128xf32> to vector<8xf32>
    %2 = vector.shape_cast %1 : vector<8xf32> to vector<8x1xf32>
    %cst_1 = arith.constant 7.812500e-03 : f32
    %3 = vector.broadcast %cst_1 : f32 to vector<8x1xf32>
    %4 = arith.mulf %2, %3 : vector<8x1xf32>
    %5 = vector.broadcast %4 : vector<8x1xf32> to vector<8x128xf32>
    %6 = arith.subf %0, %5 : vector<8x128xf32>
    %7 = arith.mulf %6, %6 : vector<8x128xf32>
    %cst_2 = arith.constant dense<0.000000e+00> : vector<8xf32>
    %8 = vector.multi_reduction <add>, %7, %cst_2 [1] : vector<8x128xf32> to vector<8xf32>
    %9 = vector.shape_cast %8 : vector<8xf32> to vector<8x1xf32>
    %cst_3 = arith.constant 7.812500e-03 : f32
    %10 = vector.broadcast %cst_3 : f32 to vector<8x1xf32>
    %11 = arith.mulf %9, %10 : vector<8x1xf32>
    %cst_4 = arith.constant 9.99999974E-6 : f32
    %12 = vector.broadcast %cst_4 : f32 to vector<8x1xf32>
    %13 = arith.addf %11, %12 : vector<8x1xf32>
    %14 = math.rsqrt %13 : vector<8x1xf32>
    %c0_5 = arith.constant 0 : index
    %c0_6 = arith.constant 0 : index
    %15 = vector.load %arg2[%c0_5, %c0_6] : memref<1x128xf32, #tpu.memory_space<vmem>>, vector<1x128xf32>
    %c0_7 = arith.constant 0 : index
    %c0_8 = arith.constant 0 : index
    %16 = vector.load %arg3[%c0_7, %c0_8] : memref<1x128xf32, #tpu.memory_space<vmem>>, vector<1x128xf32>
    %17 = vector.broadcast %14 : vector<8x1xf32> to vector<8x128xf32>
    %18 = arith.mulf %6, %17 : vector<8x128xf32>
    %19 = vector.broadcast %15 : vector<1x128xf32> to vector<8x128xf32>
    %20 = arith.mulf %18, %19 : vector<8x128xf32>
    %21 = vector.broadcast %16 : vector<1x128xf32> to vector<8x128xf32>
    %22 = arith.addf %20, %21 : vector<8x128xf32>
    %23 = arith.truncf %22 : vector<8x128xf32> to vector<8x128xbf16>
    %c0_9 = arith.constant 0 : index
    %c0_10 = arith.constant 0 : index
    %24 = vector.load %arg4[%c0_9, %c0_10] : memref<128x128xbf16, #tpu.memory_space<vmem>>, vector<128x128xbf16>
    %cst_11 = arith.constant dense<0.000000e+00> : vector<8x128xf32>
    %25 = tpu.matmul %23, %24, %cst_11 {dimension_numbers = #tpu.dot_dimension_numbers<[1], [0], [0], [1], [0, 0, 1, 1], [], []>} : vector<8x128xbf16>, vector<128x128xbf16>, vector<8x128xf32> -> vector<8x128xf32>
    %c0_12 = arith.constant 0 : index
    %c0_13 = arith.constant 0 : index
    %26 = vector.load %arg5[%c0_12, %c0_13] : memref<1x128xf32, #tpu.memory_space<vmem>>, vector<1x128xf32>
    %27 = vector.broadcast %26 : vector<1x128xf32> to vector<8x128xf32>
    %28 = arith.addf %25, %27 : vector<8x128xf32>
    %c0_14 = arith.constant 0 : index
    %c0_15 = arith.constant 0 : index
    %29 = vector.load %arg6[%c0_14, %c0_15] : memref<8x128xf32, #tpu.memory_space<vmem>>, vector<8x128xf32>
    tpu.vector_store %arg6[%c0_14, %c0_15], %28 {strides = array<i32>} : memref<8x128xf32, #tpu.memory_space<vmem>>, vector<8x128xf32>,
    return
  }
  func.func @transform_0(%arg0: i32) -> (i32, i32) {
    %c0_i32 = arith.constant 0 : i32
    %c0_i32_0 = arith.constant 0 : i32
    return %arg0, %c0_i32 : i32, i32
  }
  func.func @transform_1(%arg0: i32) -> (i32, i32) {
    %c0_i32 = arith.constant 0 : i32
    %c0_i32_0 = arith.constant 0 : i32
    %c0_i32_1 = arith.constant 0 : i32
    return %c0_i32, %c0_i32_0 : i32, i32
  }
  func.func @transform_2(%arg0: i32) -> (i32, i32) {
    %c0_i32 = arith.constant 0 : i32
    %c0_i32_0 = arith.constant 0 : i32
    %c0_i32_1 = arith.constant 0 : i32
    return %c0_i32, %c0_i32_0 : i32, i32
  }
  func.func @transform_3(%arg0: i32) -> (i32, i32) {
    %c0_i32 = arith.constant 0 : i32
    %c0_i32_0 = arith.constant 0 : i32
    %c0_i32_1 = arith.constant 0 : i32
    return %c0_i32, %c0_i32_0 : i32, i32
  }
  func.func @transform_4(%arg0: i32) -> (i32, i32) {
    %c0_i32 = arith.constant 0 : i32
    %c0_i32_0 = arith.constant 0 : i32
    %c0_i32_1 = arith.constant 0 : i32
    return %c0_i32, %c0_i32_0 : i32, i32
  }
  func.func @transform_5(%arg0: i32) -> (i32, i32) {
    %c0_i32 = arith.constant 0 : i32
    %c0_i32_0 = arith.constant 0 : i32
    return %arg0, %c0_i32 : i32, i32
  }
}

</mosaic_0001>

<llo_original>
// kernel: pallas_prenorm_linear.1
$region0: #{pallas_prenorm_linear.1}
  #allocation0 [shape = 'u32[]', space=smem, size = 0x4, offset = 0x4, fixed_abs, tag = 'smem constant byte address 0x4 - core index']
  #allocation1 [shape = 'u32[144,128]{1,0:T(1,128)}', space=vmem, size = 0x12000, scoped, tag = 'internal scratch']
  %s0 = inlined_call_operand.vmem [shape: f32[16,128], index: 0, kind: input, shape index: {}]
  %s1 = inlined_call_operand.vmem [shape: f32[1,128], index: 1, kind: input, shape index: {}]
  %s2 = inlined_call_operand.vmem [shape: f32[1,128], index: 2, kind: input, shape index: {}]
  %s3 = inlined_call_operand.vmem [shape: bf16[128,128], index: 3, kind: input, shape index: {}]
  %s4 = inlined_call_operand.vmem [shape: f32[1,128], index: 4, kind: input, shape index: {}]
  %s5 = inlined_call_operand.hbm [shape: f32[16,128], index: 5, kind: output, shape index: {}]
  %s6 = sld [smem:[#allocation0]]
  $region53: #{pallas_prenorm_linear.1} parent=0
    _
  %s8 = ssub.s32 1, %s6
  %s9 = scalar_select 0, %s8, %s6
  $region1: #{pallas_prenorm_linear.1} parent=0
    #allocation2 [shape = 'u8[8192]{0}', space=vmem, size = 0x2000, scoped, tag = 'output window, operand 0']
    #allocation3 [shape = 's32[2]{0}', space=sflag, size = 0x8, scoped, tag = 'scoped memory for pallas_prenorm_linear.1']
    %10 = vsyncpa [#allocation3], 0
    %s11 = scalar_lea.sflag [#allocation3], 1
    %12 = vsyncpa %s11, 0
    loop: start=0, step=1, limit=4
    $region2: #{pallas_prenorm_linear.1} parent=1 // loop_pre_header
      _
    $region3: #{pallas_prenorm_linear.1} parent=1 // loop_header
      %s14 = sphi 0, %s18
      %p15 = scmp.ge.s32.totalorder %s14, 4
      %s24 = sphi 0, %s26
      %s27 = sphi 0, %s24
      %s28 = sphi 0, %s27
      %s44 = sphi 0, %s28
      %s48 = sphi 0, %s48
      %s50 = sphi 0, %s48
      %s51 = sphi 0, %s50
      %s65 = sphi 0, %s51
      %s69 = sphi 0, %s69
      %s71 = sphi 0, %s69
      %s72 = sphi 0, %s71
      %s86 = sphi 0, %s72
      %s90 = sphi 0, %s90
      %s92 = sphi 0, %s90
      %s93 = sphi 0, %s92
      %s107 = sphi 0, %s93
      %s111 = sphi 0, %s111
      %s113 = sphi 0, %s111
      %s114 = sphi 0, %s113
      %s128 = sphi 0, %s114
      %s134 = sphi 0, %s136
      %s137 = sphi 0, %s134
      %s138 = sphi 0, %s137
      %s154 = sphi 0, %s138
    $region4: #{pallas_prenorm_linear.1} parent=1 // loop_header_branch
      %17 = sbr.rel (%p15) target = $region8
    $region5: #{pallas_prenorm_linear.1} parent=1 // loop_body
      %s19 = ssub.s32 %s14, 1
      %s20 = ssub.s32 %s14, 2
      %s21 = sadd.s32 %s14, 1
      %s22 = ssub.s32 %s14, %s21
      %p23 = scmp.eq.s32.totalorder %s22, 0
      %s25 = sadd.s32 %s24, 1
      %s26 = scalar_select %p23, %s24, %s25
      %p29 = pneg %p23
      %p30 = scmp.eq.s32.totalorder %s14, 1
      %p31 = por %p29, %p30
      %p32 = scmp.ne.s32.totalorder %s24, %s27
      %p33 = scmp.eq.s32.totalorder %s14, 0
      %p34 = por %p32, %p33
      %p35 = scmp.ne.s32.totalorder %s24, %s27
      %p36 = scmp.eq.s32.totalorder %s19, 1
      %p37 = por %p35, %p36
      %p38 = scmp.ne.s32.totalorder %s27, %s28
      %p39 = scmp.eq.s32.totalorder %s19, 0
      %p40 = por %p38, %p39
      %p41 = scmp.ne.s32.totalorder %s27, %s28
      %p42 = scmp.eq.s32.totalorder %s20, 1
      %p43 = por %p41, %p42
      %p45 = scmp.ne.s32.totalorder %s28, %s44
      %p46 = scmp.eq.s32.totalorder %s20, 0
      %p47 = por %p45, %p46
      %s49 = sadd.s32 %s48, 1
      %p52 = scmp.eq.s32.totalorder %s14, 1
      %p53 = scmp.ne.s32.totalorder %s48, %s50
      %p54 = scmp.eq.s32.totalorder %s14, 0
      %p55 = por %p53, %p54
      %p56 = scmp.ne.s32.totalorder %s48, %s50
      %p57 = scmp.eq.s32.totalorder %s19, 1
      %p58 = por %p56, %p57
      %p59 = scmp.ne.s32.totalorder %s50, %s51
      %p60 = scmp.eq.s32.totalorder %s19, 0
      %p61 = por %p59, %p60
      %p62 = scmp.ne.s32.totalorder %s50, %s51
      %p63 = scmp.eq.s32.totalorder %s20, 1
      %p64 = por %p62, %p63
      %p66 = scmp.ne.s32.totalorder %s51, %s65
      %p67 = scmp.eq.s32.totalorder %s20, 0
      %p68 = por %p66, %p67
      %s70 = sadd.s32 %s69, 1
      %p73 = scmp.eq.s32.totalorder %s14, 1
      %p74 = scmp.ne.s32.totalorder %s69, %s71
      %p75 = scmp.eq.s32.totalorder %s14, 0
      %p76 = por %p74, %p75
      %p77 = scmp.ne.s32.totalorder %s69, %s71
      %p78 = scmp.eq.s32.totalorder %s19, 1
      %p79 = por %p77, %p78
      %p80 = scmp.ne.s32.totalorder %s71, %s72
      %p81 = scmp.eq.s32.totalorder %s19, 0
      %p82 = por %p80, %p81
      %p83 = scmp.ne.s32.totalorder %s71, %s72
      %p84 = scmp.eq.s32.totalorder %s20, 1
      %p85 = por %p83, %p84
      %p87 = scmp.ne.s32.totalorder %s72, %s86
      %p88 = scmp.eq.s32.totalorder %s20, 0
      %p89 = por %p87, %p88
      %s91 = sadd.s32 %s90, 1
      %p94 = scmp.eq.s32.totalorder %s14, 1
      %p95 = scmp.ne.s32.totalorder %s90, %s92
      %p96 = scmp.eq.s32.totalorder %s14, 0
      %p97 = por %p95, %p96
      %p98 = scmp.ne.s32.totalorder %s90, %s92
      %p99 = scmp.eq.s32.totalorder %s19, 1
      %p100 = por %p98, %p99
      %p101 = scmp.ne.s32.totalorder %s92, %s93
      %p102 = scmp.eq.s32.totalorder %s19, 0
      %p103 = por %p101, %p102
      %p104 = scmp.ne.s32.totalorder %s92, %s93
      %p105 = scmp.eq.s32.totalorder %s20, 1
      %p106 = por %p104, %p105
      %p108 = scmp.ne.s32.totalorder %s93, %s107
      %p109 = scmp.eq.s32.totalorder %s20, 0
      %p110 = por %p108, %p109
      %s112 = sadd.s32 %s111, 1
      %p115 = scmp.eq.s32.totalorder %s14, 1
      %p116 = scmp.ne.s32.totalorder %s111, %s113
      %p117 = scmp.eq.s32.totalorder %s14, 0
      %p118 = por %p116, %p117
      %p119 = scmp.ne.s32.totalorder %s111, %s113
      %p120 = scmp.eq.s32.totalorder %s19, 1
      %p121 = por %p119, %p120
      %p122 = scmp.ne.s32.totalorder %s113, %s114
      %p123 = scmp.eq.s32.totalorder %s19, 0
      %p124 = por %p122, %p123
      %p125 = scmp.ne.s32.totalorder %s113, %s114
      %p126 = scmp.eq.s32.totalorder %s20, 1
      %p127 = por %p125, %p126
      %p129 = scmp.ne.s32.totalorder %s114, %s128
      %p130 = scmp.eq.s32.totalorder %s20, 0
      %p131 = por %p129, %p130
      %s132 = ssub.s32 %s14, %s21
      %p133 = scmp.eq.s32.totalorder %s132, 0
      %s135 = sadd.s32 %s134, 1
      %s136 = scalar_select %p133, %s134, %s135
      %p139 = pneg %p133
      %p140 = scmp.eq.s32.totalorder %s14, 1
      %p141 = por %p139, %p140
      %p142 = scmp.ne.s32.totalorder %s134, %s137
      %p143 = scmp.eq.s32.totalorder %s14, 0
      %p144 = por %p142, %p143
      %p145 = scmp.ne.s32.totalorder %s134, %s137
      %p146 = scmp.eq.s32.totalorder %s19, 1
      %p147 = por %p145, %p146
      %p148 = scmp.ne.s32.totalorder %s137, %s138
      %p149 = scmp.eq.s32.totalorder %s19, 0
      %p150 = por %p148, %p149
      %p151 = scmp.ne.s32.totalorder %s137, %s138
      %p152 = scmp.eq.s32.totalorder %s20, 1
      %p153 = por %p151, %p152
      %p155 = scmp.ne.s32.totalorder %s138, %s154
      %p156 = scmp.eq.s32.totalorder %s20, 0
      %p157 = por %p155, %p156
      %p158 = scmp.le.s32.totalorder 1, %s14
      %p159 = scmp.lt.s32.totalorder %s14, 3
      %p160 = pnand %p158, %p159
      %p161 = pneg %p160
      // Predicated region
      $region9: #{pallas_prenorm_linear.1} parent=5 // pred_check
        _
      $region10: #{pallas_prenorm_linear.1} parent=5 // pred_check_branch
        %163 = sbr.rel (%p160) target = $region12
      $region11: #{pallas_prenorm_linear.1} parent=5 // pred_region
        %s164 = ssub.s32 %s14, 1
        // Predicated region
        $region13: #{pallas_prenorm_linear.1} parent=11 // pred_check
          %p165 = pneg %p61
        $region14: #{pallas_prenorm_linear.1} parent=11 // pred_check_branch
          %167 = sbr.rel (%p165) target = $region16
        $region15: #{pallas_prenorm_linear.1} parent=11 // pred_region
          _
        $region16: #{pallas_prenorm_linear.1} parent=11 // pred_fallthru
          _
        // Predicated region
        $region17: #{pallas_prenorm_linear.1} parent=11 // pred_check
          %p168 = pneg %p82
        $region18: #{pallas_prenorm_linear.1} parent=11 // pred_check_branch
          %170 = sbr.rel (%p168) target = $region20
        $region19: #{pallas_prenorm_linear.1} parent=11 // pred_region
          _
        $region20: #{pallas_prenorm_linear.1} parent=11 // pred_fallthru
          _
        // Predicated region
        $region21: #{pallas_prenorm_linear.1} parent=11 // pred_check
          %p171 = pneg %p103
        $region22: #{pallas_prenorm_linear.1} parent=11 // pred_check_branch
          %173 = sbr.rel (%p171) target = $region24
        $region23: #{pallas_prenorm_linear.1} parent=11 // pred_region
          _
        $region24: #{pallas_prenorm_linear.1} parent=11 // pred_fallthru
          _
        // Predicated region
        $region25: #{pallas_prenorm_linear.1} parent=11 // pred_check
          %p174 = pneg %p124
        $region26: #{pallas_prenorm_linear.1} parent=11 // pred_check_branch
          %176 = sbr.rel (%p174) target = $region28
        $region27: #{pallas_prenorm_linear.1} parent=11 // pred_region
          _
        $region28: #{pallas_prenorm_linear.1} parent=11 // pred_fallthru
          _
      $region12: #{pallas_prenorm_linear.1} parent=5 // pred_fallthru
        _
      %p177 = scmp.lt.s32.totalorder %s14, 2
      // Predicated region
      $region29: #{pallas_prenorm_linear.1} parent=5 // pred_check
        %p178 = pneg %p177
      $region30: #{pallas_prenorm_linear.1} parent=5 // pred_check_branch
        %180 = sbr.rel (%p178) target = $region32
      $region31: #{pallas_prenorm_linear.1} parent=5 // pred_region
        // Predicated region
        $region33: #{pallas_prenorm_linear.1} parent=31 // pred_check
          %p181 = pneg %p34
        $region34: #{pallas_prenorm_linear.1} parent=31 // pred_check_branch
          %183 = sbr.rel (%p181) target = $region36
        $region35: #{pallas_prenorm_linear.1} parent=31 // pred_region
          %p184 = scmp.lt.s32.totalorder %s14, 1
          %s185 = scalar_select %p184, %s14, 1
          %s186 = smul.addr %s185, 8
          %s187 = scalar_lea.vmem %s0, %s186
        $region36: #{pallas_prenorm_linear.1} parent=31 // pred_fallthru
          _
      $region32: #{pallas_prenorm_linear.1} parent=5 // pred_fallthru
        _
      %p188 = scmp.le.s32.totalorder 1, %s14
      %p189 = scmp.lt.s32.totalorder %s14, 3
      %p190 = pnand %p188, %p189
      %p191 = pneg %p190
      // Predicated region
      $region37: #{pallas_prenorm_linear.1} parent=5 // pred_check
        _
      $region38: #{pallas_prenorm_linear.1} parent=5 // pred_check_branch
        %193 = sbr.rel (%p190) target = $region40
      $region39: #{pallas_prenorm_linear.1} parent=5 // pred_region
        %s194 = ssub.s32 %s14, 1
        %p195 = scmp.lt.s32.totalorder %s19, 1
        %s196 = scalar_select %p195, %s19, 1
        %s197 = smul.addr %s196, 8
        %s198 = scalar_lea.vmem %s0, %s197
        %p199 = pneg %p40
        %p200 = pneg %p37
        %p201 = pneg %p61
        %p202 = pneg %p58
        %p203 = pneg %p82
        %p204 = pneg %p79
        %p205 = pneg %p103
        %p206 = pneg %p100
        %p207 = pneg %p124
        %p208 = pneg %p121
        %p209 = pneg %p150
        %p210 = pneg %p147
        %s211 = sand.u32 %s137, 1
        %s212 = scalar_lea.sflag [#allocation3], %s211
        %s213 = sand.u32 %s137, 1
        %s214 = smul.addr %s213, 8
        %s215 = scalar_lea.vmem [#allocation2], %s214
        %p216 = scmp.lt.s32.totalorder %s19, 1
        %s217 = scalar_select %p216, %s19, 1
        %s218 = smul.addr %s217, 8
        %s219 = scalar_lea.vmem %s0, %s218
        %v221 = vld [vmem:[%s219] sm:$0xff]
        %222 = vadd.xlane.f32.xlu0 %v221
        %v223 = vpop.xlane.xlu0 %222
        %v224 = vmul.f32 %v223, 0.0078125
        %v225 = vsub.f32 %v221, %v224
        %v226 = vmul.f32 %v225, %v225
        %227 = vadd.xlane.f32.xlu0 %v226
        %v228 = vpop.xlane.xlu0 %227
        %v229 = vmul.f32 %v228, 0.0078125
        %v230 = vadd.f32 %v229, 1e-05
        %v231 = vrsqrt.pop %v230
        %v232 = vld [vmem:[%s1] sm:$0x1]
        %v233 = vld [vmem:[%s2] sm:$0x1]
        %v234 = vmul.f32 %v225, %v231
        %v236 = vlaneseq
        %v237 = vshrl.u32 %v236, 7
        %v238 = vsub.s32 0, %v237
        %v239 = vrot.slane %v232, %v238
        %v241 = vmul.f32 %v234, %v239
        %v243 = vlaneseq
        %v244 = vshrl.u32 %v243, 7
        %v245 = vsub.s32 0, %v244
        %v246 = vrot.slane %v233, %v245
        %v248 = vadd.f32 %v241, %v246
        %v249 = vpack.c.bf16 %v248, %v248
        %v250 = vld [vmem:[%s3] sm:$0xf]
        %v251 = vld [vmem:[%s3 + $0x4] sm:$0xf]
        %v252 = vld [vmem:[%s3 + $0x8] sm:$0xf]
        %v253 = vld [vmem:[%s3 + $0xc] sm:$0xf]
        %v254 = vld [vmem:[%s3 + $0x10] sm:$0xf]
        %v255 = vld [vmem:[%s3 + $0x14] sm:$0xf]
        %v256 = vld [vmem:[%s3 + $0x18] sm:$0xf]
        %v257 = vld [vmem:[%s3 + $0x1c] sm:$0xf]
        %v258 = vld [vmem:[%s3 + $0x20] sm:$0xf]
        %v259 = vld [vmem:[%s3 + $0x24] sm:$0xf]
        %v260 = vld [vmem:[%s3 + $0x28] sm:$0xf]
        %v261 = vld [vmem:[%s3 + $0x2c] sm:$0xf]
        %v262 = vld [vmem:[%s3 + $0x30] sm:$0xf]
        %v263 = vld [vmem:[%s3 + $0x34] sm:$0xf]
        %v264 = vld [vmem:[%s3 + $0x38] sm:$0xf]
        %v265 = vld [vmem:[%s3 + $0x3c] sm:$0xf]
        %v266 = vld [vmem:[%s4] sm:$0x1]
        %v268 = vlaneseq
        %v269 = vshrl.u32 %v268, 7
        %v270 = vsub.s32 0, %v269
        %v271 = vrot.slane %v266, %v270
        %v289 = vunpack.c.l.b16 %v250
        %v290 = vunpack.c.l.b16 %v251
        %v291 = vunpack.c.l.b16 %v252
        %v292 = vunpack.c.l.b16 %v253
        %v293 = vunpack.c.l.b16 %v254
        %v294 = vunpack.c.l.b16 %v255
        %v295 = vunpack.c.l.b16 %v256
        %v296 = vunpack.c.l.b16 %v257
        %v297 = vunpack.c.l.b16 %v258
        %v298 = vunpack.c.l.b16 %v259
        %v299 = vunpack.c.l.b16 %v260
        %v300 = vunpack.c.l.b16 %v261
        %v301 = vunpack.c.l.b16 %v262
        %v302 = vunpack.c.l.b16 %v263
        %v303 = vunpack.c.l.b16 %v264
        %v304 = vunpack.c.l.b16 %v265
        %v305 = vpack.c.b16 %v290, %v289
        %v306 = vpack.c.b16 %v292, %v291
        %v307 = vpack.c.b16 %v294, %v293
        %v308 = vpack.c.b16 %v296, %v295
        %v309 = vpack.c.b16 %v298, %v297
        %v310 = vpack.c.b16 %v300, %v299
        %v311 = vpack.c.b16 %v302, %v301
        %v312 = vpack.c.b16 %v304, %v303
        %321 = vmatprep.subr.bf16.mxu0 0
        %322 = vmatpush1.bf16.msra.mxu0 %v312
        %323 = vmatprep.subr.bf16.mxu0 0
        %324 = vmatpush1.bf16.msra.mxu0 %v311
        %325 = vmatprep.subr.bf16.mxu0 0
        %326 = vmatpush1.bf16.msra.mxu0 %v310
        %327 = vmatprep.subr.bf16.mxu0 0
        %328 = vmatpush1.bf16.msra.mxu0 %v309
        %329 = vmatprep.subr.bf16.mxu0 0
        %330 = vmatpush1.bf16.msra.mxu0 %v308
        %331 = vmatprep.subr.bf16.mxu0 0
        %332 = vmatpush1.bf16.msra.mxu0 %v307
        %333 = vmatprep.subr.bf16.mxu0 0
        %334 = vmatpush1.bf16.msra.mxu0 %v306
        %335 = vmatprep.subr.bf16.mxu0 0
        %336 = vmatpush1.bf16.msra.mxu0 %v305
        %337 = vmatprep.subr.bf16.mxu0 0
        %338 = vmatpush2.bf16.msra.mxu0 0
        %339 = vmatprep.subr.bf16.mxu0 0
        %340 = vmatpush2.bf16.msra.mxu0 0
        %341 = vmatprep.subr.bf16.mxu0 0
        %342 = vmatpush2.bf16.msra.mxu0 0
        %343 = vmatprep.subr.bf16.mxu0 0
        %344 = vmatpush2.bf16.msra.mxu0 0
        %345 = vmatprep.subr.bf16.mxu0 0
        %346 = vmatpush2.bf16.msra.mxu0 0
        %347 = vmatprep.subr.bf16.mxu0 0
        %348 = vmatpush2.bf16.msra.mxu0 0
        %349 = vmatprep.subr.bf16.mxu0 0
        %350 = vmatpush2.bf16.msra.mxu0 0
        %351 = vmatprep.subr.bf16.mxu0 0
        %352 = vmatpush2.bf16.msra.mxu0 0
        %353 = vmatprep.mubr.bf16.mxu0 0
        %354 = vmatmul.mubr.bf16.gmra.mxu0 %v249
        %v355 = vpop.f32.mrf.mxu0
        %v356 = vadd.f32 %v271, %v355
        %v357 = vpop.f32.mrf.mxu0
        %v358 = vpop.f32.mrf.mxu0
        %v359 = vpop.f32.mrf.mxu0
        %360 = vdwg.mxu0
        %361 = vst [vmem:[%s215] sm:$0xff] %v356
        %s362 = sand.u32 %s137, 1
        %s363 = scalar_lea.sflag [#allocation3], %s362
        %s364 = sand.u32 %s137, 1
        %s365 = smul.addr %s364, 8
        %s366 = scalar_lea.vmem [#allocation2], %s365
        // Predicated region
        $region41: #{pallas_prenorm_linear.1} parent=39 // pred_check
          %p367 = pneg %p147
        $region42: #{pallas_prenorm_linear.1} parent=39 // pred_check_branch
          %369 = sbr.rel (%p367) target = $region44
        $region43: #{pallas_prenorm_linear.1} parent=39 // pred_region
          %s371 = ssub.s32 128, 128
          %372 = vsyncadd %s363, %s371
          %s373 = smul.addr %s19, 128
          %s374 = scalar_lea.hbm %s5, %s373
          %s376 = sshll.u32 %s366, 4
          %s377 = int_to_ptr.vmem [resolvable:$true] %s376
          %379 = dma.vmem_to_hbm [thread:$0]  %s377, 128, %s374, %s363
        $region44: #{pallas_prenorm_linear.1} parent=39 // pred_fallthru
          _
      $region40: #{pallas_prenorm_linear.1} parent=5 // pred_fallthru
        _
      %p380 = scmp.le.s32.totalorder 2, %s14
      // Predicated region
      $region45: #{pallas_prenorm_linear.1} parent=5 // pred_check
        %p381 = pneg %p380
      $region46: #{pallas_prenorm_linear.1} parent=5 // pred_check_branch
        %383 = sbr.rel (%p381) target = $region48
      $region47: #{pallas_prenorm_linear.1} parent=5 // pred_region
        %s384 = ssub.s32 %s14, 2
        // Predicated region
        $region49: #{pallas_prenorm_linear.1} parent=47 // pred_check
          %p385 = pneg %p153
        $region50: #{pallas_prenorm_linear.1} parent=47 // pred_check_branch
          %387 = sbr.rel (%p385) target = $region52
        $region51: #{pallas_prenorm_linear.1} parent=47 // pred_region
          %s388 = sand.u32 %s138, 1
          %s389 = scalar_lea.sflag [#allocation3], %s388
          %s390 = sand.u32 %s138, 1
          %s391 = smul.addr %s390, 8
          %s392 = scalar_lea.vmem [#allocation2], %s391
          %393 = dma.done %s389, 128
        $region52: #{pallas_prenorm_linear.1} parent=47 // pred_fallthru
          _
      $region48: #{pallas_prenorm_linear.1} parent=5 // pred_fallthru
        _
    $region6: #{pallas_prenorm_linear.1} parent=1 // loop_footer
      %s18 = sadd.s32 1, %s14
    $region7: #{pallas_prenorm_linear.1} parent=1 // loop_footer_branch
      %13 = sbr.rel target = $region3
    $region8: #{pallas_prenorm_linear.1} parent=1 // loop_exit
      _
    %394 = vsyncpa [#allocation3], 1
    %s395 = scalar_lea.sflag [#allocation3], 1
    %396 = vsyncpa %s395, 1

</llo_original>
